<compile_context>
chip_gen: v6e
topology: v6e:2x2x1
jax: 0.10.0
libtpu: 0.0.40
codegen_flags: <defaults>
</compile_context>

<pallas_src>
import jax
import jax.numpy as jnp
from jax import lax
from jax.experimental import pallas as pl
from jax.experimental.pallas import tpu as pltpu

# ---- config mirroring the PyTorch module __init__ -------------------------
NUM_NODE  = 16
EMBED_DIM = 32
NUM_EMB   = NUM_NODE + 1          # max_in_degree == max_out_degree == N + 1


def _round_up(x, m):
    return (x + m - 1) // m * m


K_ROWS = _round_up(2 * NUM_EMB, 8)    # stacked-table rows, padded to sublane multiple


# ---- Pallas kernel ---------------------------------------------------------
def centrality_pe_kernel(adj_ref, table_ref, o_ref):
    # adj_ref: (1, N, N) f32    table_ref: (K_ROWS, D) f32    o_ref: (1, N, D) f32
    adj = (adj_ref[0] != 0).astype(jnp.float32)              # count edges, not weights

    out_deg = jnp.sum(adj,   axis=1, keepdims=True)          # (N, 1) row sums
    in_deg  = jnp.sum(adj.T, axis=1, keepdims=True)          # (N, 1) col sums; one in-kernel
                                                              # 16x16 transpose (XLU, ~free)

    n = adj.shape[0]
    k = table_ref.shape[0]
    # keep the compare in int32 (degrees are small exact integers); tiny (N,1) casts
    out_deg_i = out_deg.astype(jnp.int32)
    in_deg_i  = in_deg.astype(jnp.int32)
    iota_k = lax.broadcasted_iota(jnp.int32, (n, k), 1)

    # two-hot: hit the in-table at in_deg (rows 0..NUM_EMB-1) and the out-table
    # at NUM_EMB + out_deg (rows NUM_EMB..2*NUM_EMB-1); one MXU matmul fuses
    # both embedding lookups and the add.  NOTE: the offset is the NUM_EMB
    # constant, NOT the block row count, so it stays correct under batching /
    # future row tiling.
    twohot = ((iota_k == in_deg_i) | (iota_k == (out_deg_i + NUM_EMB))).astype(jnp.float32)

    o_ref[0] = jnp.dot(twohot, table_ref[...],
                       preferred_element_type=jnp.float32).astype(o_ref.dtype)


# ---- one-time (module-init) table prep -------------------------------------
def prepare_centrality_table(in_table, out_table):
    """Stack [in_table; out_table] and pad rows to K_ROWS. Call ONCE at init."""
    table = jnp.concatenate([in_table, out_table], axis=0).astype(jnp.float32)  # (2*NUM_EMB, D)
    return jnp.pad(table, ((0, K_ROWS - table.shape[0]), (0, 0)))               # (K_ROWS, D)


# ---- forward wrapper --------------------------------------------------------
def centrality_pe_forward(dense_adj, table):
    """dense_adj: [N, N] or [B, N, N]; table: (K_ROWS, D) from prepare_centrality_table.

    Returns [N, D] (single graph) or [B, N, D] (batched).
    """
    squeeze = dense_adj.ndim == 2
    adj = dense_adj[None] if squeeze else dense_adj
    adj = adj.astype(jnp.float32)                            # no-op when already f32
    b, n, _ = adj.shape
    d = table.shape[1]

    out = pl.pallas_call(
        centrality_pe_kernel,
        out_shape=jax.ShapeDtypeStruct((b, n, d), jnp.float32),
        grid=(b,),                                           # one grid step per graph
        in_specs=[
            pl.BlockSpec((1, n, n),     lambda i: (i, 0, 0)),
            pl.BlockSpec((K_ROWS, d),   lambda i: (0, 0)),   # same table block every step
        ],
        out_specs=pl.BlockSpec((1, n, d), lambda i: (i, 0, 0)),
        compiler_params=pltpu.CompilerParams(
            dimension_semantics=("parallel",)),              # v7x: shard batch across 2 TCs
    )(adj, table)

    return out[0] if squeeze else out


# ---- independent reference (plain JAX gather) ------------------------------
def reference(dense_adj, in_table, out_table):
    nz = (dense_adj != 0).astype(jnp.int32)
    out_deg = jnp.sum(nz, axis=1)
    in_deg  = jnp.sum(nz, axis=0)
    return in_table[in_deg] + out_table[out_deg]


if __name__ == "__main__":
    key = jax.random.PRNGKey(0)
    k_adj, k_in, k_out = jax.random.split(key, 3)

    # small deterministic inputs: batch of 2 unweighted (0/1) 16-node graphs, embed_dim = 32
    BATCH = 2
    adj = (jax.random.uniform(k_adj, (BATCH, NUM_NODE, NUM_NODE)) < 0.35).astype(jnp.float32)

    # nn.Embedding(N+1, D, padding_idx=0): row 0 is zeros
    in_table  = jax.random.normal(k_in,  (NUM_EMB, EMBED_DIM), jnp.float32).at[0].set(0.0)
    out_table = jax.random.normal(k_out, (NUM_EMB, EMBED_DIM), jnp.float32).at[0].set(0.0)

    # init-time table prep (hoisted out of the per-call wrapper)
    table = prepare_centrality_table(in_table, out_table)

    # batched forward
    out = centrality_pe_forward(adj, table)
    out = jax.block_until_ready(out)
    assert out.shape == (BATCH, NUM_NODE, EMBED_DIM)
    for g in range(BATCH):
        ref = reference(adj[g], in_table, out_table)
        assert jnp.allclose(out[g], ref, atol=1e-5, rtol=1e-5)

    # single-graph path (matches the original module's forward signature)
    out1 = jax.block_until_ready(centrality_pe_forward(adj[0], table))
    assert out1.shape == (NUM_NODE, EMBED_DIM)
    assert jnp.allclose(out1, reference(adj[0], in_table, out_table), atol=1e-5, rtol=1e-5)

    print("KERNEL_OK")
</pallas_src>

<mosaic_0001>
module attributes {stable_mosaic.version = 11 : i64} {
  func.func @centrality_pe_kernel(%arg0: i32, %arg1: memref<1x16x16xf32, #tpu.memory_space<vmem>>, %arg2: memref<40x32xf32, #tpu.memory_space<vmem>>, %arg3: memref<1x16x32xf32, #tpu.memory_space<vmem>>) attributes {dimension_semantics = [#tpu.dimension_semantics<parallel>], iteration_bounds = array<i64: 2>, scalar_prefetch = 0 : i64, scratch_operands = 0 : i64, tpu.core_type = #tpu.core_type<tc>, window_params = [{transform_indices = @transform_0, window_bounds = array<i64: 1, 16, 16>}, {pipeline_mode = #tpu.pipeline_mode<synchronous>, transform_indices = @transform_1, window_bounds = array<i64: 40, 32>}, {transform_indices = @transform_2, window_bounds = array<i64: 1, 16, 32>}]} {
    %c0 = arith.constant 0 : index
    %c0_0 = arith.constant 0 : index
    %c0_1 = arith.constant 0 : index
    %0 = vector.load %arg1[%c0, %c0_0, %c0_1] : memref<1x16x16xf32, #tpu.memory_space<vmem>>, vector<1x16x16xf32>
    %1 = vector.shape_cast %0 : vector<1x16x16xf32> to vector<16x16xf32>
    %cst = arith.constant 0.000000e+00 : f32
    %2 = vector.broadcast %cst : f32 to vector<16x16xf32>
    %3 = arith.cmpf one, %1, %2 : vector<16x16xf32>
    %4 = arith.extui %3 : vector<16x16xi1> to vector<16x16xi32>
    %5 = arith.sitofp %4 : vector<16x16xi32> to vector<16x16xf32>
    %cst_2 = arith.constant dense<0.000000e+00> : vector<16xf32>
    %6 = vector.multi_reduction <add>, %5, %cst_2 [1] : vector<16x16xf32> to vector<16xf32>
    %7 = vector.shape_cast %6 : vector<16xf32> to vector<16x1xf32>
    %8 = tpu.transpose %5, [1, 0] : vector<16x16xf32> -> vector<16x16xf32>
    %cst_3 = arith.constant dense<0.000000e+00> : vector<16xf32>
    %9 = vector.multi_reduction <add>, %8, %cst_3 [1] : vector<16x16xf32> to vector<16xf32>
    %10 = vector.shape_cast %9 : vector<16xf32> to vector<16x1xf32>
    %11 = arith.fptosi %7 : vector<16x1xf32> to vector<16x1xi32>
    %12 = arith.fptosi %10 : vector<16x1xf32> to vector<16x1xi32>
    %13 = tpu.iota {dimensions = array<i32: 1>} : vector<16x40xi32>
    %14 = vector.broadcast %12 : vector<16x1xi32> to vector<16x40xi32>
    %15 = arith.cmpi eq, %13, %14 : vector<16x40xi32>
    %c17_i32 = arith.constant 17 : i32
    %16 = vector.broadcast %c17_i32 : i32 to vector<16x1xi32>
    %17 = arith.addi %11, %16 : vector<16x1xi32>
    %18 = vector.broadcast %17 : vector<16x1xi32> to vector<16x40xi32>
    %19 = arith.cmpi eq, %13, %18 : vector<16x40xi32>
    %20 = arith.ori %15, %19 : vector<16x40xi1>
    %21 = arith.extui %20 : vector<16x40xi1> to vector<16x40xi32>
    %22 = arith.sitofp %21 : vector<16x40xi32> to vector<16x40xf32>
    %c0_4 = arith.constant 0 : index
    %c0_5 = arith.constant 0 : index
    %23 = vector.load %arg2[%c0_4, %c0_5] : memref<40x32xf32, #tpu.memory_space<vmem>>, vector<40x32xf32>
    %cst_6 = arith.constant dense<0.000000e+00> : vector<16x32xf32>
    %24 = tpu.matmul %22, %23, %cst_6 {dimension_numbers = #tpu.dot_dimension_numbers<[1], [0], [0], [1], [0, 0, 1, 1], [], []>} : vector<16x40xf32>, vector<40x32xf32>, vector<16x32xf32> -> vector<16x32xf32>
    %c0_7 = arith.constant 0 : index
    %c0_8 = arith.constant 0 : index
    %c0_9 = arith.constant 0 : index
    %25 = vector.load %arg3[%c0_7, %c0_8, %c0_9] : memref<1x16x32xf32, #tpu.memory_space<vmem>>, vector<1x16x32xf32>
    %26 = vector.shape_cast %25 : vector<1x16x32xf32> to vector<16x32xf32>
    %27 = vector.shape_cast %24 : vector<16x32xf32> to vector<1x16x32xf32>
    tpu.vector_store %arg3[%c0_7, %c0_8, %c0_9], %27 {strides = array<i32>} : memref<1x16x32xf32, #tpu.memory_space<vmem>>, vector<1x16x32xf32>,
    return
  }
  func.func @transform_0(%arg0: i32) -> (i32, i32, i32) {
    %c0_i32 = arith.constant 0 : i32
    %c0_i32_0 = arith.constant 0 : i32
    %c0_i32_1 = arith.constant 0 : i32
    return %arg0, %c0_i32, %c0_i32_0 : i32, i32, i32
  }
  func.func @transform_1(%arg0: i32) -> (i32, i32) {
    %c0_i32 = arith.constant 0 : i32
    %c0_i32_0 = arith.constant 0 : i32
    %c0_i32_1 = arith.constant 0 : i32
    return %c0_i32, %c0_i32_0 : i32, i32
  }
  func.func @transform_2(%arg0: i32) -> (i32, i32, i32) {
    %c0_i32 = arith.constant 0 : i32
    %c0_i32_0 = arith.constant 0 : i32
    %c0_i32_1 = arith.constant 0 : i32
    return %arg0, %c0_i32, %c0_i32_0 : i32, i32, i32
  }
}

</mosaic_0001>

<llo_original>
// kernel: tpu_custom_call.1
$region0: #{tpu_custom_call.1}
  #allocation0 [shape = 'u32[]', space=smem, size = 0x4, offset = 0x4, fixed_abs, tag = 'smem constant byte address 0x4 - core index']
  #allocation1 [shape = 'u32[144,128]{1,0:T(1,128)}', space=vmem, size = 0x12000, scoped, tag = 'internal scratch']
  %s0 = inlined_call_operand.vmem [shape: f32[2,16,16], index: 0, kind: input, shape index: {}]
  %s1 = inlined_call_operand.vmem [shape: f32[40,32], index: 1, kind: input, shape index: {}]
  %s2 = inlined_call_operand.hbm [shape: f32[2,16,32], index: 2, kind: output, shape index: {}]
  %s3 = sld [smem:[#allocation0]]
  $region41: #{tpu_custom_call.1} parent=0
    _
  %s5 = ssub.s32 1, %s3
  %s6 = scalar_select 0, %s5, %s3
  $region1: #{tpu_custom_call.1} parent=0
    #allocation2 [shape = 'u8[16384]{0}', space=vmem, size = 0x4000, scoped, tag = 'output window, operand 0']
    #allocation3 [shape = 's32[2]{0}', space=sflag, size = 0x8, scoped, tag = 'scoped memory for tpu_custom_call.1']
    %7 = vsyncpa [#allocation3], 0
    %s8 = scalar_lea.sflag [#allocation3], 1
    %9 = vsyncpa %s8, 0
    loop: start=0, step=1, limit=4
    $region2: #{tpu_custom_call.1} parent=1 // loop_pre_header
      _
    $region3: #{tpu_custom_call.1} parent=1 // loop_header
      %s11 = sphi 0, %s15
      %p12 = scmp.ge.s32.totalorder %s11, 4
      %s21 = sphi 0, %s23
      %s24 = sphi 0, %s21
      %s25 = sphi 0, %s24
      %s41 = sphi 0, %s25
      %s45 = sphi 0, %s45
      %s47 = sphi 0, %s45
      %s48 = sphi 0, %s47
      %s62 = sphi 0, %s48
      %s68 = sphi 0, %s70
      %s71 = sphi 0, %s68
      %s72 = sphi 0, %s71
      %s88 = sphi 0, %s72
    $region4: #{tpu_custom_call.1} parent=1 // loop_header_branch
      %14 = sbr.rel (%p12) target = $region8
    $region5: #{tpu_custom_call.1} parent=1 // loop_body
      %s16 = ssub.s32 %s11, 1
      %s17 = ssub.s32 %s11, 2
      %s18 = sadd.s32 %s11, 1
      %s19 = ssub.s32 %s11, %s18
      %p20 = scmp.eq.s32.totalorder %s19, 0
      %s22 = sadd.s32 %s21, 1
      %s23 = scalar_select %p20, %s21, %s22
      %p26 = pneg %p20
      %p27 = scmp.eq.s32.totalorder %s11, 1
      %p28 = por %p26, %p27
      %p29 = scmp.ne.s32.totalorder %s21, %s24
      %p30 = scmp.eq.s32.totalorder %s11, 0
      %p31 = por %p29, %p30
      %p32 = scmp.ne.s32.totalorder %s21, %s24
      %p33 = scmp.eq.s32.totalorder %s16, 1
      %p34 = por %p32, %p33
      %p35 = scmp.ne.s32.totalorder %s24, %s25
      %p36 = scmp.eq.s32.totalorder %s16, 0
      %p37 = por %p35, %p36
      %p38 = scmp.ne.s32.totalorder %s24, %s25
      %p39 = scmp.eq.s32.totalorder %s17, 1
      %p40 = por %p38, %p39
      %p42 = scmp.ne.s32.totalorder %s25, %s41
      %p43 = scmp.eq.s32.totalorder %s17, 0
      %p44 = por %p42, %p43
      %s46 = sadd.s32 %s45, 1
      %p49 = scmp.eq.s32.totalorder %s11, 1
      %p50 = scmp.ne.s32.totalorder %s45, %s47
      %p51 = scmp.eq.s32.totalorder %s11, 0
      %p52 = por %p50, %p51
      %p53 = scmp.ne.s32.totalorder %s45, %s47
      %p54 = scmp.eq.s32.totalorder %s16, 1
      %p55 = por %p53, %p54
      %p56 = scmp.ne.s32.totalorder %s47, %s48
      %p57 = scmp.eq.s32.totalorder %s16, 0
      %p58 = por %p56, %p57
      %p59 = scmp.ne.s32.totalorder %s47, %s48
      %p60 = scmp.eq.s32.totalorder %s17, 1
      %p61 = por %p59, %p60
      %p63 = scmp.ne.s32.totalorder %s48, %s62
      %p64 = scmp.eq.s32.totalorder %s17, 0
      %p65 = por %p63, %p64
      %s66 = ssub.s32 %s11, %s18
      %p67 = scmp.eq.s32.totalorder %s66, 0
      %s69 = sadd.s32 %s68, 1
      %s70 = scalar_select %p67, %s68, %s69
      %p73 = pneg %p67
      %p74 = scmp.eq.s32.totalorder %s11, 1
      %p75 = por %p73, %p74
      %p76 = scmp.ne.s32.totalorder %s68, %s71
      %p77 = scmp.eq.s32.totalorder %s11, 0
      %p78 = por %p76, %p77
      %p79 = scmp.ne.s32.totalorder %s68, %s71
      %p80 = scmp.eq.s32.totalorder %s16, 1
      %p81 = por %p79, %p80
      %p82 = scmp.ne.s32.totalorder %s71, %s72
      %p83 = scmp.eq.s32.totalorder %s16, 0
      %p84 = por %p82, %p83
      %p85 = scmp.ne.s32.totalorder %s71, %s72
      %p86 = scmp.eq.s32.totalorder %s17, 1
      %p87 = por %p85, %p86
      %p89 = scmp.ne.s32.totalorder %s72, %s88
      %p90 = scmp.eq.s32.totalorder %s17, 0
      %p91 = por %p89, %p90
      %p92 = scmp.le.s32.totalorder 1, %s11
      %p93 = scmp.lt.s32.totalorder %s11, 3
      %p94 = pnand %p92, %p93
      %p95 = pneg %p94
      // Predicated region
      $region9: #{tpu_custom_call.1} parent=5 // pred_check
        _
      $region10: #{tpu_custom_call.1} parent=5 // pred_check_branch
        %97 = sbr.rel (%p94) target = $region12
      $region11: #{tpu_custom_call.1} parent=5 // pred_region
        %s98 = ssub.s32 %s11, 1
        // Predicated region
        $region13: #{tpu_custom_call.1} parent=11 // pred_check
          %p99 = pneg %p58
        $region14: #{tpu_custom_call.1} parent=11 // pred_check_branch
          %101 = sbr.rel (%p99) target = $region16
        $region15: #{tpu_custom_call.1} parent=11 // pred_region
          _
        $region16: #{tpu_custom_call.1} parent=11 // pred_fallthru
          _
      $region12: #{tpu_custom_call.1} parent=5 // pred_fallthru
        _
      %p102 = scmp.lt.s32.totalorder %s11, 2
      // Predicated region
      $region17: #{tpu_custom_call.1} parent=5 // pred_check
        %p103 = pneg %p102
      $region18: #{tpu_custom_call.1} parent=5 // pred_check_branch
        %105 = sbr.rel (%p103) target = $region20
      $region19: #{tpu_custom_call.1} parent=5 // pred_region
        // Predicated region
        $region21: #{tpu_custom_call.1} parent=19 // pred_check
          %p106 = pneg %p31
        $region22: #{tpu_custom_call.1} parent=19 // pred_check_branch
          %108 = sbr.rel (%p106) target = $region24
        $region23: #{tpu_custom_call.1} parent=19 // pred_region
          %p109 = scmp.lt.s32.totalorder %s11, 1
          %s110 = scalar_select %p109, %s11, 1
          %s111 = smul.addr %s110, 2
          %s112 = smul.addr %s111, 8
          %s113 = scalar_lea.vmem %s0, %s112
        $region24: #{tpu_custom_call.1} parent=19 // pred_fallthru
          _
      $region20: #{tpu_custom_call.1} parent=5 // pred_fallthru
        _
      %p114 = scmp.le.s32.totalorder 1, %s11
      %p115 = scmp.lt.s32.totalorder %s11, 3
      %p116 = pnand %p114, %p115
      %p117 = pneg %p116
      // Predicated region
      $region25: #{tpu_custom_call.1} parent=5 // pred_check
        _
      $region26: #{tpu_custom_call.1} parent=5 // pred_check_branch
        %119 = sbr.rel (%p116) target = $region28
      $region27: #{tpu_custom_call.1} parent=5 // pred_region
        %s120 = ssub.s32 %s11, 1
        %p121 = scmp.lt.s32.totalorder %s16, 1
        %s122 = scalar_select %p121, %s16, 1
        %s123 = smul.addr %s122, 2
        %s124 = smul.addr %s123, 8
        %s125 = scalar_lea.vmem %s0, %s124
        %p126 = pneg %p37
        %p127 = pneg %p34
        %p128 = pneg %p58
        %p129 = pneg %p55
        %p130 = pneg %p84
        %p131 = pneg %p81
        %s132 = sand.u32 %s71, 1
        %s133 = scalar_lea.sflag [#allocation3], %s132
        %s134 = sand.u32 %s71, 1
        %s135 = smul.addr %s134, 16
        %s136 = scalar_lea.vmem [#allocation2], %s135
        %p137 = scmp.lt.s32.totalorder %s16, 1
        %s138 = scalar_select %p137, %s16, 1
        %s139 = smul.addr %s138, 2
        %s140 = smul.addr %s139, 8
        %s141 = scalar_lea.vmem %s0, %s140
        %v142 = vld [vmem:[%s141] sm:$0xff]
        %v143 = vld [vmem:[%s141 + $0x8] sm:$0xff]
        %vm144 = vcmp.ne.f32.partialorder %v142, 0.0
        %vm145 = vcmp.ne.f32.partialorder %v143, 0.0
        %v146 = vsel %vm144, 1, 0
        %v147 = vsel %vm145, 1, 0
        %v148 = vcvt.s32.f32 %v146
        %v149 = vcvt.s32.f32 %v147
        %vm150 = vcmask 130048
        %v151 = vsel %vm150, %v148, 0.0
        %152 = vadd.xlane.f32.xlu0 %v151
        %v153 = vpop.xlane.xlu0 %152
        %v154 = vsel %vm150, %v149, 0.0
        %155 = vadd.xlane.f32.xlu0 %v154
        %v156 = vpop.xlane.xlu0 %155
        %157 = vxpose.xlu0.b32.start [1/16] %v148, 128
        %158 = vxpose.xlu0.b32.cont [2/16] %v149, 128
        %159 = vxpose.xlu0.b32.cont [3/16] 0.0, 128
        %160 = vxpose.xlu0.b32.cont [4/16] 0.0, 128
        %161 = vxpose.xlu0.b32.cont [5/16] 0.0, 128
        %162 = vxpose.xlu0.b32.cont [6/16] 0.0, 128
        %163 = vxpose.xlu0.b32.cont [7/16] 0.0, 128
        %164 = vxpose.xlu0.b32.cont [8/16] 0.0, 128
        %165 = vxpose.xlu0.b32.cont [9/16] 0.0, 128
        %166 = vxpose.xlu0.b32.cont [10/16] 0.0, 128
        %167 = vxpose.xlu0.b32.cont [11/16] 0.0, 128
        %168 = vxpose.xlu0.b32.cont [12/16] 0.0, 128
        %169 = vxpose.xlu0.b32.cont [13/16] 0.0, 128
        %170 = vxpose.xlu0.b32.cont [14/16] 0.0, 128
        %171 = vxpose.xlu0.b32.cont [15/16] 0.0, 128
        %172 = vxpose.xlu0.b32.end [16/16] 0.0, 128
        %v173 = vpop.trf.xlu0
        %v174 = vpop.trf.xlu0
        %v175 = vpop.trf.xlu0
        %v176 = vpop.trf.xlu0
        %v177 = vpop.trf.xlu0
        %v178 = vpop.trf.xlu0
        %v179 = vpop.trf.xlu0
        %v180 = vpop.trf.xlu0
        %v181 = vpop.trf.xlu0
        %v182 = vpop.trf.xlu0
        %v183 = vpop.trf.xlu0
        %v184 = vpop.trf.xlu0
        %v185 = vpop.trf.xlu0
        %v186 = vpop.trf.xlu0
        %v187 = vpop.trf.xlu0
        %v188 = vpop.trf.xlu0
        %v189 = vsel %vm150, %v173, 0.0
        %190 = vadd.xlane.f32.xlu0 %v189
        %v191 = vpop.xlane.xlu0 %190
        %v192 = vsel %vm150, %v174, 0.0
        %193 = vadd.xlane.f32.xlu0 %v192
        %v194 = vpop.xlane.xlu0 %193
        %v195 = vcvt.f32.s32.to.zero.pseudo %v153
        %v196 = vcvt.f32.s32.to.zero.pseudo %v156
        %v197 = vcvt.f32.s32.to.zero.pseudo %v191
        %v198 = vcvt.f32.s32.to.zero.pseudo %v194
        %v199 = vlaneseq
        %v200 = vand.u32 %v199, 127
        %vm201 = vcmp.eq.s32.totalorder %v200, %v197
        %vm202 = vcmp.eq.s32.totalorder %v200, %v198
        %v203 = vadd.s32 %v195, 17
        %v204 = vadd.s32 %v196, 17
        %vm205 = vcmp.eq.s32.totalorder %v200, %v203
        %vm206 = vcmp.eq.s32.totalorder %v200, %v204
        %vm207 = vmor %vm201, %vm205
        %vm208 = vmor %vm202, %vm206
        %v209 = vsel %vm207, 1, 0
        %v210 = vsel %vm208, 1, 0
        %v211 = vcvt.s32.f32 %v209
        %v212 = vcvt.s32.f32 %v210
        %v213 = vld [vmem:[%s1] sm:$0xff]
        %v214 = vld [vmem:[%s1 + $0x8] sm:$0xff]
        %v215 = vld [vmem:[%s1 + $0x10] sm:$0xff]
        %v216 = vld [vmem:[%s1 + $0x18] sm:$0xff]
        %v217 = vld [vmem:[%s1 + $0x20] sm:$0xff]
        %vm218 = vcmask 326656
        %v220 = vsel %vm218, %v211, 0
        %v223 = vsel %vm218, %v212, 0
        %225 = vmatprep.subr.mxu0 0.0
        %226 = vmatpush1.msra.mxu0 0.0
        %227 = vmatprep.subr.mxu0 0.0
        %228 = vmatpush1.msra.mxu0 0.0
        %229 = vmatprep.subr.mxu0 0.0
        %230 = vmatpush1.msra.mxu0 0.0
        %231 = vmatprep.subr.mxu0 0.0
        %232 = vmatpush1.msra.mxu0 0.0
        %233 = vmatprep.subr.mxu0 0.0
        %234 = vmatpush1.msra.mxu0 0.0
        %235 = vmatprep.subr.mxu0 0.0
        %236 = vmatpush1.msra.mxu0 0.0
        %237 = vmatprep.subr.mxu0 0.0
        %238 = vmatpush1.msra.mxu0 0.0
        %239 = vmatprep.subr.mxu0 0.0
        %240 = vmatpush1.msra.mxu0 0.0
        %241 = vmatprep.subr.mxu0 0.0
        %242 = vmatpush1.msra.mxu0 0.0
        %243 = vmatprep.subr.mxu0 0.0
        %244 = vmatpush1.msra.mxu0 0.0
        %245 = vmatprep.subr.mxu0 0.0
        %246 = vmatpush1.msra.mxu0 0.0
        %247 = vmatprep.subr.mxu0 0.0
        %248 = vmatpush1.msra.mxu0 %v217
        %249 = vmatprep.subr.mxu0 0.0
        %250 = vmatpush1.msra.mxu0 %v216
        %251 = vmatprep.subr.mxu0 0.0
        %252 = vmatpush1.msra.mxu0 %v215
        %253 = vmatprep.subr.mxu0 0.0
        %254 = vmatpush1.msra.mxu0 %v214
        %255 = vmatprep.subr.mxu0 0.0
        %256 = vmatpush1.msra.mxu0 %v213
        %257 = vmatprep.subr.mxu0 0.0
        %258 = vmatpush2.msra.mxu0 0.0
        %259 = vmatprep.subr.mxu0 0.0
        %260 = vmatpush2.msra.mxu0 0.0
        %261 = vmatprep.subr.mxu0 0.0
        %262 = vmatpush2.msra.mxu0 0.0
        %263 = vmatprep.subr.mxu0 0.0
        %264 = vmatpush2.msra.mxu0 0.0
        %265 = vmatprep.subr.mxu0 0.0
        %266 = vmatpush2.msra.mxu0 0.0
        %267 = vmatprep.subr.mxu0 0.0
        %268 = vmatpush2.msra.mxu0 0.0
        %269 = vmatprep.subr.mxu0 0.0
        %270 = vmatpush2.msra.mxu0 0.0
        %271 = vmatprep.subr.mxu0 0.0
        %272 = vmatpush2.msra.mxu0 0.0
        %273 = vmatprep.subr.mxu0 0.0
        %274 = vmatpush2.msra.mxu0 0.0
        %275 = vmatprep.subr.mxu0 0.0
        %276 = vmatpush2.msra.mxu0 0.0
        %277 = vmatprep.subr.mxu0 0.0
        %278 = vmatpush2.msra.mxu0 0.0
        %279 = vmatprep.subr.mxu0 0.0
        %280 = vmatpush2.msra.mxu0 0.0
        %281 = vmatprep.subr.mxu0 0.0
        %282 = vmatpush2.msra.mxu0 0.0
        %283 = vmatprep.subr.mxu0 0.0
        %284 = vmatpush2.msra.mxu0 0.0
        %285 = vmatprep.subr.mxu0 0.0
        %286 = vmatpush2.msra.mxu0 0.0
        %287 = vmatprep.subr.mxu0 0.0
        %288 = vmatpush2.msra.mxu0 0.0
        %289 = vmatprep.mubr.f32.mxu0 0.0
        %290 = vmatmul.mubr.f32.gmra.mxu0 %v220
        %v291 = vpop.f32.mrf.mxu0
        %v292 = vadd.f32 0.0, %v291
        %v293 = vpop.f32.mrf.mxu0
        %294 = vmatprep.mubr.f32.mxu0 0.0
        %295 = vmatmul.mubr.f32.gmra.mxu0 %v223
        %v296 = vpop.f32.mrf.mxu0
        %v297 = vadd.f32 0.0, %v296
        %v298 = vpop.f32.mrf.mxu0
        %299 = vdwg.mxu0
        %vm300 = vcmask 261120
        %301 = vst.msk [vmem:[%s136] sm:$0xff] %vm300, %v292
        %302 = vst.msk [vmem:[%s136 + $0x8] sm:$0xff] %vm300, %v297
        %s303 = sand.u32 %s71, 1
        %s304 = scalar_lea.sflag [#allocation3], %s303
        %s305 = sand.u32 %s71, 1
        %s306 = smul.addr %s305, 16
        %s307 = scalar_lea.vmem [#allocation2], %s306
        // Predicated region
        $region29: #{tpu_custom_call.1} parent=27 // pred_check
          %p308 = pneg %p81
        $region30: #{tpu_custom_call.1} parent=27 // pred_check_branch
          %310 = sbr.rel (%p308) target = $region32
        $region31: #{tpu_custom_call.1} parent=27 // pred_region
          %s312 = ssub.s32 256, 256
          %313 = vsyncadd %s304, %s312
          %s314 = smul.addr %s16, 2
          %s315 = smul.addr %s314, 128
          %s316 = scalar_lea.hbm %s2, %s315
          %s317 = sshll.u32 %s307, 4
          %s318 = int_to_ptr.vmem [resolvable:$true] %s317
          %323 = dma.vmem_to_hbm [thread:$0]  %s318, 256, %s316, %s304, 128, 128, 8
        $region32: #{tpu_custom_call.1} parent=27 // pred_fallthru
          _
      $region28: #{tpu_custom_call.1} parent=5 // pred_fallthru
        _
      %p324 = scmp.le.s32.totalorder 2, %s11
      // Predicated region
      $region33: #{tpu_custom_call.1} parent=5 // pred_check
        %p325 = pneg %p324
      $region34: #{tpu_custom_call.1} parent=5 // pred_check_branch
        %327 = sbr.rel (%p325) target = $region36
      $region35: #{tpu_custom_call.1} parent=5 // pred_region
        %s328 = ssub.s32 %s11, 2
        // Predicated region
        $region37: #{tpu_custom_call.1} parent=35 // pred_check
          %p329 = pneg %p87
        $region38: #{tpu_custom_call.1} parent=35 // pred_check_branch
          %331 = sbr.rel (%p329) target = $region40
        $region39: #{tpu_custom_call.1} parent=35 // pred_region
          %s332 = sand.u32 %s72, 1
          %s333 = scalar_lea.sflag [#allocation3], %s332
          %s334 = sand.u32 %s72, 1
          %s335 = smul.addr %s334, 16
          %s336 = scalar_lea.vmem [#allocation2], %s335
          %337 = dma.done %s333, 256
        $region40: #{tpu_custom_call.1} parent=35 // pred_fallthru
          _
      $region36: #{tpu_custom_call.1} parent=5 // pred_fallthru
        _
    $region6: #{tpu_custom_call.1} parent=1 // loop_footer
      %s15 = sadd.s32 1, %s11
    $region7: #{tpu_custom_call.1} parent=1 // loop_footer_branch
      %10 = sbr.rel target = $region3
    $region8: #{tpu_custom_call.1} parent=1 // loop_exit
      _
    %338 = vsyncpa [#allocation3], 1
    %s339 = scalar_lea.sflag [#allocation3], 1
    %340 = vsyncpa %s339, 1

</llo_original>
